<compile_context>
chip_gen: v7x
topology: tpu7x:2x2x1
jax: 0.10.0
libtpu: 0.0.40
codegen_flags: <defaults>
</compile_context>

<pallas_src>
import functools

import jax
import jax.numpy as jnp
from jax.experimental import pallas as pl
from jax.experimental.pallas import tpu as pltpu


def _pad_to(n, m):
    return ((n + m - 1) // m) * m


# ----------------------------------------------------------------------------
# Pallas kernel: tiled  out = act( A @ B + bias )
# ----------------------------------------------------------------------------
def _matmul_kernel(a_ref, b_ref, bias_ref, o_ref, acc_ref, *, apply_act):
    k = pl.program_id(2)

    @pl.when(k == 0)
    def _():
        acc_ref[...] = jnp.zeros_like(acc_ref)

    acc_ref[...] += jnp.dot(
        a_ref[...], b_ref[...], preferred_element_type=jnp.float32
    )

    @pl.when(k == pl.num_programs(2) - 1)
    def _():
        h = acc_ref[...] + bias_ref[...]          # bias broadcast over rows
        if apply_act:
            h = jnp.maximum(h, 0.0)               # ReLU (VPU, f32)
        o_ref[...] = h.astype(o_ref.dtype)


# Tile caps: large multiples of (8, 128), small enough to double-buffer inside
# the default scoped-VMEM budget on every generation (v5e/v6e/v7x).
_TM_MAX, _TN_MAX, _TK_MAX = 256, 256, 512


def tiled_matmul(a, b, bias=None, *, apply_act=False):
    """out = act(a @ b + bias).  bf16 MXU inputs, f32 accumulation/output."""
    m, k = a.shape
    k2, n = b.shape
    assert k == k2, (a.shape, b.shape)

    # Pad so tiles are (8, 128)-aligned and divide every dim evenly.
    mp0 = _pad_to(m, 8)
    kp0 = _pad_to(k, 128)
    np0 = _pad_to(n, 128)
    tm = mp0 if mp0 <= _TM_MAX else _TM_MAX
    tk = kp0 if kp0 <= _TK_MAX else _TK_MAX
    tn = np0 if np0 <= _TN_MAX else _TN_MAX
    mp = _pad_to(mp0, tm)
    kp = _pad_to(kp0, tk)
    npad = _pad_to(np0, tn)

    a_p = jnp.zeros((mp, kp), jnp.bfloat16).at[:m, :k].set(a.astype(jnp.bfloat16))
    b_p = jnp.zeros((kp, npad), jnp.bfloat16).at[:k, :n].set(b.astype(jnp.bfloat16))
    if bias is None:
        bias_p = jnp.zeros((1, npad), jnp.float32)
    else:
        bias_p = (
            jnp.zeros((1, npad), jnp.float32).at[0, :n].set(bias.astype(jnp.float32))
        )

    grid = (mp // tm, npad // tn, kp // tk)
    kernel = functools.partial(_matmul_kernel, apply_act=apply_act)

    cost = pl.CostEstimate(
        flops=2 * mp * kp * npad,
        transcendentals=0,
        bytes_accessed=(mp * kp + kp * npad) * 2 + (mp * npad + npad) * 4,
    )

    out = pl.pallas_call(
        kernel,
        out_shape=jax.ShapeDtypeStruct((mp, npad), jnp.float32),
        grid_spec=pltpu.PrefetchScalarGridSpec(
            num_scalar_prefetch=0,
            grid=grid,
            in_specs=[
                pl.BlockSpec((tm, tk), lambda i, j, kk: (i, kk)),
                pl.BlockSpec((tk, tn), lambda i, j, kk: (kk, j)),
                pl.BlockSpec((1, tn), lambda i, j, kk: (0, j)),
            ],
            out_specs=pl.BlockSpec((tm, tn), lambda i, j, kk: (i, j)),
            scratch_shapes=[pltpu.VMEM((tm, tn), jnp.float32)],
        ),
        compiler_params=pltpu.CompilerParams(
            dimension_semantics=("parallel", "parallel", "arbitrary"),
        ),
        cost_estimate=cost,
    )(a_p, b_p, bias_p)

    return out[:m, :n]


# ----------------------------------------------------------------------------
# One GCN layer = two tiled Pallas matmul passes.
# Association chosen so the N^2 aggregation uses the smaller feature width.
# ----------------------------------------------------------------------------
def gcn_layer(a_hat, x, w, b, *, apply_act):
    f_in, f_out = w.shape
    if f_in <= f_out:
        # (A_hat @ X) @ W : aggregate with the narrow input width first.
        ax = tiled_matmul(a_hat, x)                                   # [N, Fin]
        return tiled_matmul(ax, w, bias=b, apply_act=apply_act)       # [N, Fout]
    else:
        # A_hat @ (X @ W) : transform down to the narrow output width first.
        xw = tiled_matmul(x, w)                                       # [N, Fout]
        return tiled_matmul(a_hat, xw, bias=b, apply_act=apply_act)   # [N, Fout]


# ----------------------------------------------------------------------------
# Plain-JAX glue: dense symmetric-normalized adjacency from edge_index
# ----------------------------------------------------------------------------
def normalized_adjacency(edge_index, num_nodes):
    src, dst = edge_index[0], edge_index[1]
    a = jnp.zeros((num_nodes, num_nodes), jnp.float32)
    a = a.at[src, dst].set(1.0)
    a = jnp.maximum(a, a.T)                        # symmetrize
    a = a + jnp.eye(num_nodes, dtype=jnp.float32)  # self loops
    deg = jnp.sum(a, axis=1)
    d_inv_sqrt = jax.lax.rsqrt(deg)
    return a * d_inv_sqrt[:, None] * d_inv_sqrt[None, :]


# ----------------------------------------------------------------------------
# Deterministic parameter initialization
# ----------------------------------------------------------------------------
def glorot(key, shape, gain=1.0):
    fan_in, fan_out = shape[0], shape[1]
    limit = gain * jnp.sqrt(6.0 / (fan_in + fan_out))
    return jax.random.uniform(key, shape, jnp.float32, -limit, limit)


def xavier_normal(key, shape, gain=1.0):
    fan_in, fan_out = shape[1], shape[0]
    std = gain * jnp.sqrt(2.0 / (fan_in + fan_out))
    return std * jax.random.normal(key, shape, jnp.float32)


class GraphMAE2:
    """JAX/Pallas port of GraphMAE2.forward: runs the 2-layer GCN encoder and
    returns the list of per-layer node representations (lrgae convention)."""

    def __init__(self, key, in_channels, hidden_channels, out_channels):
        k = jax.random.split(key, 6)
        self.in_channels = in_channels
        self.out_channels = out_channels
        # encoder params (2-layer GCN)
        self.w1 = glorot(k[0], (in_channels, hidden_channels))
        self.b1 = jnp.zeros((hidden_channels,), jnp.float32)
        self.w2 = glorot(k[1], (hidden_channels, out_channels))
        self.b2 = jnp.zeros((out_channels,), jnp.float32)
        # mask tokens (xavier_normal_, as in reset_parameters_for_token);
        # not used in forward, but initialized deterministically for parity.
        self.enc_mask_token = xavier_normal(k[2], (1, in_channels))
        self.dec_mask_token = xavier_normal(k[3], (1, out_channels))
        # TODO(synk): train_step-only components (neck, decoder, projector,
        # predictor, EMA copies, SCELoss, random remasking) are not part of
        # the module's forward() and are not implemented here.

    def forward(self, x, edge_index):
        n = x.shape[0]
        # Build the normalized adjacency in f32, then store/feed it as bf16
        # (the kernel accumulates in f32).
        a_hat = normalized_adjacency(edge_index, n).astype(jnp.bfloat16)
        h1 = gcn_layer(a_hat, x, self.w1, self.b1, apply_act=True)
        h2 = gcn_layer(a_hat, h1, self.w2, self.b2, apply_act=False)
        return [h1, h2]

    def __call__(self, x, edge_index):
        return self.forward(x, edge_index)


# ----------------------------------------------------------------------------
# Pure-JAX reference (same bf16-input / f32-accumulate math) for sanity check
# ----------------------------------------------------------------------------
def reference_forward(model, x, edge_index):
    a_hat = normalized_adjacency(edge_index, x.shape[0]).astype(jnp.bfloat16)

    def mm(p, q):
        return jnp.dot(
            p.astype(jnp.bfloat16),
            q.astype(jnp.bfloat16),
            preferred_element_type=jnp.float32,
        )

    def layer(a, xx, w, b, apply_act):
        f_in, f_out = w.shape
        if f_in <= f_out:
            h = mm(mm(a, xx), w) + b
        else:
            h = mm(a, mm(xx, w)) + b
        return jnp.maximum(h, 0.0) if apply_act else h

    h1 = layer(a_hat, x, model.w1, model.b1, True)
    h2 = layer(a_hat, h1, model.w2, model.b2, False)
    return [h1, h2]


if __name__ == "__main__":
    key = jax.random.PRNGKey(0)
    k_param, k_x, k_e = jax.random.split(key, 3)

    num_nodes = 300          # pads to 512 rows -> 2 row tiles (real grid)
    in_channels = 48
    hidden_channels = 160
    out_channels = 96
    num_edges = 1500

    x = jax.random.normal(k_x, (num_nodes, in_channels), jnp.float32)
    edge_index = jax.random.randint(
        k_e, (2, num_edges), 0, num_nodes, jnp.int32
    )

    model = GraphMAE2(k_param, in_channels, hidden_channels, out_channels)

    outs = model(x, edge_index)
    outs = [jax.block_until_ready(o) for o in outs]

    refs = reference_forward(model, x, edge_index)
    for o, r in zip(outs, refs):
        assert o.shape == r.shape, (o.shape, r.shape)
        assert jnp.max(jnp.abs(o - r)) < 5e-2, float(jnp.max(jnp.abs(o - r)))

    print("KERNEL_OK")
</pallas_src>

<mosaic_0001>
module attributes {stable_mosaic.version = 11 : i64} {
  func.func @_matmul_kernel(%arg0: i32, %arg1: i32, %arg2: i32, %arg3: memref<256x384xbf16, #tpu.memory_space<vmem>>, %arg4: memref<384x128xbf16, #tpu.memory_space<vmem>>, %arg5: memref<1x128xf32, #tpu.memory_space<vmem>>, %arg6: memref<256x128xf32, #tpu.memory_space<vmem>>, %arg7: memref<256x128xf32, #tpu.memory_space<vmem>>) attributes {dimension_semantics = [#tpu.dimension_semantics<parallel>, #tpu.dimension_semantics<parallel>, #tpu.dimension_semantics<arbitrary>], iteration_bounds = array<i64: 2, 1, 1>, scalar_prefetch = 0 : i64, scratch_operands = 1 : i64, tpu.core_type = #tpu.core_type<tc>, window_params = [{transform_indices = @transform_0, window_bounds = array<i64: 256, 384>}, {transform_indices = @transform_1, window_bounds = array<i64: 384, 128>}, {transform_indices = @transform_2, window_bounds = array<i64: 1, 128>}, {transform_indices = @transform_3, window_bounds = array<i64: 256, 128>}]} {
    %c0_i32 = arith.constant 0 : i32
    %0 = arith.cmpi eq, %arg2, %c0_i32 : i32
    %1 = arith.extui %0 : i1 to i32
    %c0_i32_0 = arith.constant 0 : i32
    %2 = arith.cmpi ne, %1, %c0_i32_0 : i32
    scf.if %2 {
      %cst_10 = arith.constant 0.000000e+00 : f32
      %12 = vector.broadcast %cst_10 : f32 to vector<256x128xf32>
      %c0_11 = arith.constant 0 : index
      %c0_12 = arith.constant 0 : index
      %13 = vector.load %arg7[%c0_11, %c0_12] : memref<256x128xf32, #tpu.memory_space<vmem>>, vector<256x128xf32>
      tpu.vector_store %arg7[%c0_11, %c0_12], %12 {strides = array<i32>} : memref<256x128xf32, #tpu.memory_space<vmem>>, vector<256x128xf32>,
    } else {
    }
    %c0 = arith.constant 0 : index
    %c0_1 = arith.constant 0 : index
    %3 = vector.load %arg7[%c0, %c0_1] : memref<256x128xf32, #tpu.memory_space<vmem>>, vector<256x128xf32>
    %c0_2 = arith.constant 0 : index
    %c0_3 = arith.constant 0 : index
    %4 = vector.load %arg3[%c0_2, %c0_3] : memref<256x384xbf16, #tpu.memory_space<vmem>>, vector<256x384xbf16>
    %c0_4 = arith.constant 0 : index
    %c0_5 = arith.constant 0 : index
    %5 = vector.load %arg4[%c0_4, %c0_5] : memref<384x128xbf16, #tpu.memory_space<vmem>>, vector<384x128xbf16>
    %cst = arith.constant dense<0.000000e+00> : vector<256x128xf32>
    %6 = tpu.matmul %4, %5, %cst {dimension_numbers = #tpu.dot_dimension_numbers<[1], [0], [0], [1], [0, 0, 1, 1], [], []>} : vector<256x384xbf16>, vector<384x128xbf16>, vector<256x128xf32> -> vector<256x128xf32>
    %7 = arith.addf %3, %6 : vector<256x128xf32>
    %c0_6 = arith.constant 0 : index
    %c0_7 = arith.constant 0 : index
    %8 = vector.load %arg7[%c0_6, %c0_7] : memref<256x128xf32, #tpu.memory_space<vmem>>, vector<256x128xf32>
    tpu.vector_store %arg7[%c0_6, %c0_7], %7 {strides = array<i32>} : memref<256x128xf32, #tpu.memory_space<vmem>>, vector<256x128xf32>,
    %c0_i32_8 = arith.constant 0 : i32
    %9 = arith.cmpi eq, %arg2, %c0_i32_8 : i32
    %10 = arith.extui %9 : i1 to i32
    %c0_i32_9 = arith.constant 0 : i32
    %11 = arith.cmpi ne, %10, %c0_i32_9 : i32
    scf.if %11 {
      %c0_10 = arith.constant 0 : index
      %c0_11 = arith.constant 0 : index
      %12 = vector.load %arg7[%c0_10, %c0_11] : memref<256x128xf32, #tpu.memory_space<vmem>>, vector<256x128xf32>
      %c0_12 = arith.constant 0 : index
      %c0_13 = arith.constant 0 : index
      %13 = vector.load %arg5[%c0_12, %c0_13] : memref<1x128xf32, #tpu.memory_space<vmem>>, vector<1x128xf32>
      %14 = vector.broadcast %13 : vector<1x128xf32> to vector<256x128xf32>
      %15 = arith.addf %12, %14 : vector<256x128xf32>
      %c0_14 = arith.constant 0 : index
      %c0_15 = arith.constant 0 : index
      %16 = vector.load %arg6[%c0_14, %c0_15] : memref<256x128xf32, #tpu.memory_space<vmem>>, vector<256x128xf32>
      tpu.vector_store %arg6[%c0_14, %c0_15], %15 {strides = array<i32>} : memref<256x128xf32, #tpu.memory_space<vmem>>, vector<256x128xf32>,
    } else {
    }
    return
  }
  func.func @transform_0(%arg0: i32, %arg1: i32, %arg2: i32) -> (i32, i32) {
    %c0_i32 = arith.constant 0 : i32
    return %arg0, %arg2 : i32, i32
  }
  func.func @transform_1(%arg0: i32, %arg1: i32, %arg2: i32) -> (i32, i32) {
    %c0_i32 = arith.constant 0 : i32
    return %arg2, %arg1 : i32, i32
  }
  func.func @transform_2(%arg0: i32, %arg1: i32, %arg2: i32) -> (i32, i32) {
    %c0_i32 = arith.constant 0 : i32
    %c0_i32_0 = arith.constant 0 : i32
    return %c0_i32, %arg1 : i32, i32
  }
  func.func @transform_3(%arg0: i32, %arg1: i32, %arg2: i32) -> (i32, i32) {
    %c0_i32 = arith.constant 0 : i32
    return %arg0, %arg1 : i32, i32
  }
}

</mosaic_0001>

<llo_original>
// kernel: tpu_custom_call.1
$region0: #{tpu_custom_call.1}
  #allocation0 [shape = 'u32[]', space=smem, size = 0x4, offset = 0x4, fixed_abs, tag = 'smem constant byte address 0x4 - core index']
  #allocation1 [shape = 'u32[144,128]{1,0:T(1,128)}', space=vmem, size = 0x12000, scoped, tag = 'internal scratch']
  #allocation2 [shape = 'f32[256,128]{1,0:T(8,128)}', space=vmem, size = 0x20000, scoped, tag = 'scratch operand']
  %s0 = inlined_call_operand.hbm [shape: bf16[512,384], index: 0, kind: input, shape index: {}]
  %s1 = inlined_call_operand.hbm [shape: bf16[384,128], index: 1, kind: input, shape index: {}]
  %s2 = inlined_call_operand.vmem [shape: f32[1,128], index: 2, kind: input, shape index: {}]
  %s3 = inlined_call_operand.hbm [shape: f32[512,128], index: 3, kind: output, shape index: {}]
  %s4 = sld [smem:[#allocation0]]
  $region61: #{tpu_custom_call.1} parent=0
    _
  %s6 = ssub.s32 1, %s4
  %s7 = scalar_select 0, %s6, %s4
  $region1: #{tpu_custom_call.1} parent=0
    #allocation3 [shape = 'u8[393216]{0}', space=vmem, size = 0x60000, scoped, tag = 'input window, operand 0']
    #allocation4 [shape = 's32[2]{0}', space=sflag, size = 0x8, scoped, tag = 'scoped memory for tpu_custom_call.1']
    #allocation5 [shape = 's32[2]{0}', space=sflag, size = 0x8, scoped, tag = 'scoped memory for tpu_custom_call.1']
    #allocation6 [shape = 'u8[98304]{0}', space=vmem, size = 0x18000, scoped, tag = 'input window, operand 1, single buffered']
    #allocation7 [shape = 's32[1]{0}', space=sflag, size = 0x4, scoped, tag = 'scoped memory for tpu_custom_call.1']
    #allocation8 [shape = 'u8[262144]{0}', space=vmem, size = 0x40000, scoped, tag = 'output window, operand 0']
    %8 = vsyncpa [#allocation4], 0
    %s9 = scalar_lea.sflag [#allocation4], 1
    %10 = vsyncpa %s9, 0
    %11 = vsyncpa [#allocation7], 0
    %12 = vsyncpa [#allocation5], 0
    %s13 = scalar_lea.sflag [#allocation5], 1
    %14 = vsyncpa %s13, 0
    loop: start=0, step=1, limit=4
    $region2: #{tpu_custom_call.1} parent=1 // loop_pre_header
      _
    $region3: #{tpu_custom_call.1} parent=1 // loop_header
      %s16 = sphi 0, %s20
      %p17 = scmp.ge.s32.totalorder %s16, 4
      %s23 = sphi 0, %s42
      %s24 = sphi 0, %s38
      %s25 = sphi 0, %s34
      %s26 = sphi 0, %s23
      %s27 = sphi 0, %s24
      %s28 = sphi 0, %s25
      %s29 = sphi 0, %s26
      %s30 = sphi 0, %s27
      %s31 = sphi 0, %s28
      %s47 = sphi 0, %s49
      %s50 = sphi 0, %s47
      %s51 = sphi 0, %s50
      %s67 = sphi 0, %s51
      %s75 = sphi 0, %s77
      %s78 = sphi 0, %s75
      %s79 = sphi 0, %s78
      %s95 = sphi 0, %s79
      %s101 = sphi 0, %s103
      %s104 = sphi 0, %s101
      %s105 = sphi 0, %s104
      %s121 = sphi 0, %s105
      %s129 = sphi 0, %s131
      %s132 = sphi 0, %s129
      %s133 = sphi 0, %s132
      %s149 = sphi 0, %s133
    $region4: #{tpu_custom_call.1} parent=1 // loop_header_branch
      %19 = sbr.rel (%p17) target = $region8
    $region5: #{tpu_custom_call.1} parent=1 // loop_body
      %s21 = ssub.s32 %s16, 1
      %s22 = ssub.s32 %s16, 2
      %s32 = sadd.s32 1, %s25
      %p33 = scmp.ge.s32.totalorder %s32, 1
      %s34 = scalar_select %p33, 0, %s32
      %s35 = sadd.s32 1, %s24
      %s36 = scalar_select %p33, %s35, %s24
      %p37 = scmp.ge.s32.totalorder %s36, 1
      %s38 = scalar_select %p37, 0, %s36
      %s39 = sadd.s32 1, %s23
      %s40 = scalar_select %p37, %s39, %s23
      %p41 = scmp.ge.s32.totalorder %s40, 2
      %s42 = scalar_select %p41, 0, %s40
      %s43 = ssub.s32 %s23, %s42
      %s44 = ssub.s32 %s25, %s34
      %s45 = sor.u32 %s43, %s44
      %p46 = scmp.eq.s32.totalorder %s45, 0
      %s48 = sadd.s32 %s47, 1
      %s49 = scalar_select %p46, %s47, %s48
      %p52 = pneg %p46
      %p53 = scmp.eq.s32.totalorder %s16, 1
      %p54 = por %p52, %p53
      %p55 = scmp.ne.s32.totalorder %s47, %s50
      %p56 = scmp.eq.s32.totalorder %s16, 0
      %p57 = por %p55, %p56
      %p58 = scmp.ne.s32.totalorder %s47, %s50
      %p59 = scmp.eq.s32.totalorder %s21, 1
      %p60 = por %p58, %p59
      %p61 = scmp.ne.s32.totalorder %s50, %s51
      %p62 = scmp.eq.s32.totalorder %s21, 0
      %p63 = por %p61, %p62
      %p64 = scmp.ne.s32.totalorder %s50, %s51
      %p65 = scmp.eq.s32.totalorder %s22, 1
      %p66 = por %p64, %p65
      %p68 = scmp.ne.s32.totalorder %s51, %s67
      %p69 = scmp.eq.s32.totalorder %s22, 0
      %p70 = por %p68, %p69
      %s71 = ssub.s32 %s25, %s34
      %s72 = ssub.s32 %s24, %s38
      %s73 = sor.u32 %s71, %s72
      %p74 = scmp.eq.s32.totalorder %s73, 0
      %s76 = sadd.s32 %s75, 1
      %s77 = scalar_select %p74, %s75, %s76
      %p80 = pneg %p74
      %p81 = scmp.eq.s32.totalorder %s16, 1
      %p82 = por %p80, %p81
      %p83 = scmp.ne.s32.totalorder %s75, %s78
      %p84 = scmp.eq.s32.totalorder %s16, 0
      %p85 = por %p83, %p84
      %p86 = scmp.ne.s32.totalorder %s75, %s78
      %p87 = scmp.eq.s32.totalorder %s21, 1
      %p88 = por %p86, %p87
      %p89 = scmp.ne.s32.totalorder %s78, %s79
      %p90 = scmp.eq.s32.totalorder %s21, 0
      %p91 = por %p89, %p90
      %p92 = scmp.ne.s32.totalorder %s78, %s79
      %p93 = scmp.eq.s32.totalorder %s22, 1
      %p94 = por %p92, %p93
      %p96 = scmp.ne.s32.totalorder %s79, %s95
      %p97 = scmp.eq.s32.totalorder %s22, 0
      %p98 = por %p96, %p97
      %s99 = ssub.s32 %s24, %s38
      %p100 = scmp.eq.s32.totalorder %s99, 0
      %s102 = sadd.s32 %s101, 1
      %s103 = scalar_select %p100, %s101, %s102
      %p106 = pneg %p100
      %p107 = scmp.eq.s32.totalorder %s16, 1
      %p108 = por %p106, %p107
      %p109 = scmp.ne.s32.totalorder %s101, %s104
      %p110 = scmp.eq.s32.totalorder %s16, 0
      %p111 = por %p109, %p110
      %p112 = scmp.ne.s32.totalorder %s101, %s104
      %p113 = scmp.eq.s32.totalorder %s21, 1
      %p114 = por %p112, %p113
      %p115 = scmp.ne.s32.totalorder %s104, %s105
      %p116 = scmp.eq.s32.totalorder %s21, 0
      %p117 = por %p115, %p116
      %p118 = scmp.ne.s32.totalorder %s104, %s105
      %p119 = scmp.eq.s32.totalorder %s22, 1
      %p120 = por %p118, %p119
      %p122 = scmp.ne.s32.totalorder %s105, %s121
      %p123 = scmp.eq.s32.totalorder %s22, 0
      %p124 = por %p122, %p123
      %s125 = ssub.s32 %s23, %s42
      %s126 = ssub.s32 %s24, %s38
      %s127 = sor.u32 %s125, %s126
      %p128 = scmp.eq.s32.totalorder %s127, 0
      %s130 = sadd.s32 %s129, 1
      %s131 = scalar_select %p128, %s129, %s130
      %p134 = pneg %p128
      %p135 = scmp.eq.s32.totalorder %s16, 1
      %p136 = por %p134, %p135
      %p137 = scmp.ne.s32.totalorder %s129, %s132
      %p138 = scmp.eq.s32.totalorder %s16, 0
      %p139 = por %p137, %p138
      %p140 = scmp.ne.s32.totalorder %s129, %s132
      %p141 = scmp.eq.s32.totalorder %s21, 1
      %p142 = por %p140, %p141
      %p143 = scmp.ne.s32.totalorder %s132, %s133
      %p144 = scmp.eq.s32.totalorder %s21, 0
      %p145 = por %p143, %p144
      %p146 = scmp.ne.s32.totalorder %s132, %s133
      %p147 = scmp.eq.s32.totalorder %s22, 1
      %p148 = por %p146, %p147
      %p150 = scmp.ne.s32.totalorder %s133, %s149
      %p151 = scmp.eq.s32.totalorder %s22, 0
      %p152 = por %p150, %p151
      %p153 = scmp.le.s32.totalorder 1, %s16
      %p154 = scmp.lt.s32.totalorder %s16, 3
      %p155 = pnand %p153, %p154
      %p156 = pneg %p155
      // Predicated region
      $region9: #{tpu_custom_call.1} parent=5 // pred_check
        _
      $region10: #{tpu_custom_call.1} parent=5 // pred_check_branch
        %158 = sbr.rel (%p155) target = $region12
      $region11: #{tpu_custom_call.1} parent=5 // pred_region
        %s159 = ssub.s32 %s16, 1
        // Predicated region
        $region13: #{tpu_custom_call.1} parent=11 // pred_check
          %p160 = pneg %p91
        $region14: #{tpu_custom_call.1} parent=11 // pred_check_branch
          %162 = sbr.rel (%p160) target = $region16
        $region15: #{tpu_custom_call.1} parent=11 // pred_region
          %s163 = smul.u32 48, %s28
          %s165 = ssub.s32 3072, 3072
          %166 = vsyncadd [#allocation7], %s165
          %s167 = sadd.s32 %s27, %s163
          %s168 = smul.addr %s167, 64
          %s169 = scalar_lea.hbm %s1, %s168
          %s170 = sshll.u32 [#allocation6], 4
          %s171 = int_to_ptr.vmem [resolvable:$true] %s170
          %176 = dma.hbm_to_vmem [thread:$0]  %s169, 3072, %s171, [#allocation7], 64, 64, 4
        $region16: #{tpu_custom_call.1} parent=11 // pred_fallthru
          _
        // Predicated region
        $region17: #{tpu_custom_call.1} parent=11 // pred_check
          %p177 = pneg %p117
        $region18: #{tpu_custom_call.1} parent=11 // pred_check_branch
          %179 = sbr.rel (%p177) target = $region20
        $region19: #{tpu_custom_call.1} parent=11 // pred_region
          %p180 = scmp.lt.s32.totalorder %s27, 0
          %s181 = scalar_select %p180, %s27, 0
          %s182 = scalar_lea.vmem %s2, %s181
        $region20: #{tpu_custom_call.1} parent=11 // pred_fallthru
          _
      $region12: #{tpu_custom_call.1} parent=5 // pred_fallthru
        _
      %p183 = scmp.lt.s32.totalorder %s16, 2
      // Predicated region
      $region21: #{tpu_custom_call.1} parent=5 // pred_check
        %p184 = pneg %p183
      $region22: #{tpu_custom_call.1} parent=5 // pred_check_branch
        %186 = sbr.rel (%p184) target = $region24
      $region23: #{tpu_custom_call.1} parent=5 // pred_region
        // Predicated region
        $region25: #{tpu_custom_call.1} parent=23 // pred_check
          %p187 = pneg %p57
        $region26: #{tpu_custom_call.1} parent=23 // pred_check_branch
          %189 = sbr.rel (%p187) target = $region28
        $region27: #{tpu_custom_call.1} parent=23 // pred_region
          %s190 = sand.u32 %s47, 1
          %s191 = scalar_lea.sflag [#allocation4], %s190
          %s192 = sand.u32 %s47, 1
          %s193 = smul.addr %s192, 384
          %s194 = scalar_lea.vmem [#allocation3], %s193
          %s195 = smul.u32 32, %s23
          %s196 = smul.u32 3, %s25
          %s198 = ssub.s32 6144, 6144
          %199 = vsyncadd %s191, %s198
          %s200 = smul.addr %s195, 3
          %s201 = sadd.s32 %s196, %s200
          %s202 = smul.addr %s201, 64
          %s203 = scalar_lea.hbm %s0, %s202
          %s204 = sshll.u32 %s194, 4
          %s205 = int_to_ptr.vmem [resolvable:$true] %s204
          %210 = dma.hbm_to_vmem [thread:$0]  %s203, 6144, %s205, %s191, 192, 192, 12
        $region28: #{tpu_custom_call.1} parent=23 // pred_fallthru
          _
      $region24: #{tpu_custom_call.1} parent=5 // pred_fallthru
        _
      %p211 = scmp.le.s32.totalorder 1, %s16
      %p212 = scmp.lt.s32.totalorder %s16, 3
      %p213 = pnand %p211, %p212
      %p214 = pneg %p213
      // Predicated region
      $region29: #{tpu_custom_call.1} parent=5 // pred_check
        _
      $region30: #{tpu_custom_call.1} parent=5 // pred_check_branch
        %216 = sbr.rel (%p213) target = $region32
      $region31: #{tpu_custom_call.1} parent=5 // pred_region
        %s217 = ssub.s32 %s16, 1
        %s218 = sand.u32 %s50, 1
        %s219 = scalar_lea.sflag [#allocation4], %s218
        %s220 = sand.u32 %s50, 1
        %s221 = smul.addr %s220, 384
        %s222 = scalar_lea.vmem [#allocation3], %s221
        // Predicated region
        $region33: #{tpu_custom_call.1} parent=31 // pred_check
          %p223 = pneg %p63
        $region34: #{tpu_custom_call.1} parent=31 // pred_check_branch
          %225 = sbr.rel (%p223) target = $region36
        $region35: #{tpu_custom_call.1} parent=31 // pred_region
          %226 = dma.done %s219, 6144
        $region36: #{tpu_custom_call.1} parent=31 // pred_fallthru
          _
        // Predicated region
        $region37: #{tpu_custom_call.1} parent=31 // pred_check
          %p227 = pneg %p91
        $region38: #{tpu_custom_call.1} parent=31 // pred_check_branch
          %229 = sbr.rel (%p227) target = $region40
        $region39: #{tpu_custom_call.1} parent=31 // pred_region
          %230 = dma.done [#allocation7], 3072
        $region40: #{tpu_custom_call.1} parent=31 // pred_fallthru
          _
        %s231 = sand.u32 %s50, 1
        %s232 = scalar_lea.sflag [#allocation4], %s231
        %s233 = sand.u32 %s50, 1
        %s234 = smul.addr %s233, 384
        %s235 = scalar_lea.vmem [#allocation3], %s234
        %p236 = pneg %p63
        %p237 = pneg %p60
        %p238 = pneg %p91
        %p239 = pneg %p88
        %p240 = scmp.lt.s32.totalorder %s27, 0
        %s241 = scalar_select %p240, %s27, 0
        %s242 = scalar_lea.vmem %s2, %s241
        %p243 = pneg %p117
        %p244 = pneg %p114
        %p245 = pneg %p145
        %p246 = pneg %p142
        %s247 = sand.u32 %s132, 1
        %s248 = scalar_lea.sflag [#allocation5], %s247
        %s249 = sand.u32 %s132, 1
        %s250 = smul.addr %s249, 256
        %s251 = scalar_lea.vmem [#allocation8], %s250
        %s252 = smul.u32 32, %s26
        %s253 = smul.u32 3, %s28
        %s254 = smul.u32 48, %s28
        %p255 = scmp.lt.s32.totalorder %s27, 0
        %s256 = scalar_select %p255, %s27, 0
        %s257 = scalar_lea.vmem %s2, %s256
        %s258 = smul.u32 32, %s26
        %p260 = scmp.eq.s32.totalorder %s28, 0
        // Predicated region
        $region41: #{tpu_custom_call.1} parent=31 // pred_check
          %p261 = pneg %p260
        $region42: #{tpu_custom_call.1} parent=31 // pred_check_branch
          %263 = sbr.rel (%p261) target = $region44
        $region43: #{tpu_custom_call.1} parent=31 // pred_region
          %264 = vst [vmem:[#allocation2] sm:$0xff] 0.0
          %265 = vst [vmem:[#allocation2 + $0x8] sm:$0xff] 0.0
          %266 = vst [vmem:[#allocation2 + $0x10] sm:$0xff] 0.0
          %267 = vst [vmem:[#allocation2 + $0x18] sm:$0xff] 0.0
          %268 = vst [vmem:[#allocation2 + $0x20] sm:$0xff] 0.0
          %269 = vst [vmem:[#allocation2 + $0x28] sm:$0xff] 0.0
          %270 = vst [vmem:[#allocation2 + $0x30] sm:$0xff] 0.0
          %271 = vst [vmem:[#allocation2 + $0x38] sm:$0xff] 0.0
          %272 = vst [vmem:[#allocation2 + $0x40] sm:$0xff] 0.0
          %273 = vst [vmem:[#allocation2 + $0x48] sm:$0xff] 0.0
          %274 = vst [vmem:[#allocation2 + $0x50] sm:$0xff] 0.0
          %275 = vst [vmem:[#allocation2 + $0x58] sm:$0xff] 0.0
          %276 = vst [vmem:[#allocation2 + $0x60] sm:$0xff] 0.0
          %277 = vst [vmem:[#allocation2 + $0x68] sm:$0xff] 0.0
          %278 = vst [vmem:[#allocation2 + $0x70] sm:$0xff] 0.0
          %279 = vst [vmem:[#allocation2 + $0x78] sm:$0xff] 0.0
          %280 = vst [vmem:[#allocation2 + $0x80] sm:$0xff] 0.0
          %281 = vst [vmem:[#allocation2 + $0x88] sm:$0xff] 0.0
          %282 = vst [vmem:[#allocation2 + $0x90] sm:$0xff] 0.0
          %283 = vst [vmem:[#allocation2 + $0x98] sm:$0xff] 0.0
          %284 = vst [vmem:[#allocation2 + $0xa0] sm:$0xff] 0.0
          %285 = vst [vmem:[#allocation2 + $0xa8] sm:$0xff] 0.0
          %286 = vst [vmem:[#allocation2 + $0xb0] sm:$0xff] 0.0
          %287 = vst [vmem:[#allocation2 + $0xb8] sm:$0xff] 0.0
          %288 = vst [vmem:[#allocation2 + $0xc0] sm:$0xff] 0.0
          %289 = vst [vmem:[#allocation2 + $0xc8] sm:$0xff] 0.0
          %290 = vst [vmem:[#allocation2 + $0xd0] sm:$0xff] 0.0
          %291 = vst [vmem:[#allocation2 + $0xd8] sm:$0xff] 0.0
          %292 = vst [vmem:[#allocation2 + $0xe0] sm:$0xff] 0.0
          %293 = vst [vmem:[#allocation2 + $0xe8] sm:$0xff] 0.0
          %294 = vst [vmem:[#allocation2 + $0xf0] sm:$0xff] 0.0
          %295 = vst [vmem:[#allocation2 + $0xf8] sm:$0xff] 0.0
        $region44: #{tpu_custom_call.1} parent=31 // pred_fallthru
          _
        %v296 = vld [vmem:[#allocation2] sm:$0xff]
        %v297 = vld [vmem:[#allocation2 + $0x8] sm:$0xff]
        %v298 = vld [vmem:[#allocation2 + $0x10] sm:$0xff]
        %v299 = vld [vmem:[#allocation2 + $0x18] sm:$0xff]
        %v300 = vld [vmem:[#allocation2 + $0x20] sm:$0xff]
        %v301 = vld [vmem:[#allocation2 + $0x28] sm:$0xff]
        %v302 = vld [vmem:[#allocation2 + $0x30] sm:$0xff]
        %v303 = vld [vmem:[#allocation2 + $0x38] sm:$0xff]
        %v304 = vld [vmem:[#allocation2 + $0x40] sm:$0xff]
        %v305 = vld [vmem:[#allocation2 + $0x48] sm:$0xff]
        %v306 = vld [vmem:[#allocation2 + $0x50] sm:$0xff]
        %v307 = vld [vmem:[#allocation2 + $0x58] sm:$0xff]
        %v308 = vld [vmem:[#allocation2 + $0x60] sm:$0xff]
        %v309 = vld [vmem:[#allocation2 + $0x68] sm:$0xff]
        %v310 = vld [vmem:[#allocation2 + $0x70] sm:$0xff]
        %v311 = vld [vmem:[#allocation2 + $0x78] sm:$0xff]
        %v312 = vld [vmem:[#allocation2 + $0x80] sm:$0xff]
        %v313 = vld [vmem:[#allocation2 + $0x88] sm:$0xff]
        %v314 = vld [vmem:[#allocation2 + $0x90] sm:$0xff]
        %v315 = vld [vmem:[#allocation2 + $0x98] sm:$0xff]
        %v316 = vld [vmem:[#allocation2 + $0xa0] sm:$0xff]
        %v317 = vld [vmem:[#allocation2 + $0xa8] sm:$0xff]
        %v318 = vld [vmem:[#allocation2 + $0xb0] sm:$0xff]
        %v319 = vld [vmem:[#allocation2 + $0xb8] sm:$0xff]
        %v320 = vld [vmem:[#allocation2 + $0xc0] sm:$0xff]
        %v321 = vld [vmem:[#allocation2 + $0xc8] sm:$0xff]
        %v322 = vld [vmem:[#allocation2 + $0xd0] sm:$0xff]
        %v323 = vld [vmem:[#allocation2 + $0xd8] sm:$0xff]
        %v324 = vld [vmem:[#allocation2 + $0xe0] sm:$0xff]
        %v325 = vld [vmem:[#allocation2 + $0xe8] sm:$0xff]
        %v326 = vld [vmem:[#allocation2 + $0xf0] sm:$0xff]
        %v327 = vld [vmem:[#allocation2 + $0xf8] sm:$0xff]
        %v328 = vld [vmem:[%s222] sm:$0xff]
        %v329 = vld [vmem:[%s222 + $0x8] sm:$0xf]
        %v330 = vld [vmem:[%s222 + $0xc] sm:$0xff]
        %v331 = vld [vmem:[%s222 + $0x14] sm:$0xf]
        %v332 = vld [vmem:[%s222 + $0x18] sm:$0xff]
        %v333 = vld [vmem:[%s222 + $0x20] sm:$0xf]
        %v334 = vld [vmem:[%s222 + $0x24] sm:$0xff]
        %v335 = vld [vmem:[%s222 + $0x2c] sm:$0xf]
        %v336 = vld [vmem:[%s222 + $0x30] sm:$0xff]
        %v337 = vld [vmem:[%s222 + $0x38] sm:$0xf]
        %v338 = vld [vmem:[%s222 + $0x3c] sm:$0xff]
        %v339 = vld [vmem:[%s222 + $0x44] sm:$0xf]
        %v340 = vld [vmem:[%s222 + $0x48] sm:$0xff]
        %v341 = vld [vmem:[%s222 + $0x50] sm:$0xf]
        %v342 = vld [vmem:[%s222 + $0x54] sm:$0xff]
        %v343 = vld [vmem:[%s222 + $0x5c] sm:$0xf]
        %v344 = vld [vmem:[%s222 + $0x60] sm:$0xff]
        %v345 = vld [vmem:[%s222 + $0x68] sm:$0xf]
        %v346 = vld [vmem:[%s222 + $0x6c] sm:$0xff]
        %v347 = vld [vmem:[%s222 + $0x74] sm:$0xf]
        %v348 = vld [vmem:[%s222 + $0x78] sm:$0xff]
        %v349 = vld [vmem:[%s222 + $0x80] sm:$0xf]
        %v350 = vld [vmem:[%s222 + $0x84] sm:$0xff]
        %v351 = vld [vmem:[%s222 + $0x8c] sm:$0xf]
        %v352 = vld [vmem:[%s222 + $0x90] sm:$0xff]
        %v353 = vld [vmem:[%s222 + $0x98] sm:$0xf]
        %v354 = vld [vmem:[%s222 + $0x9c] sm:$0xff]
        %v355 = vld [vmem:[%s222 + $0xa4] sm:$0xf]
        %v356 = vld [vmem:[%s222 + $0xa8] sm:$0xff]
        %v357 = vld [vmem:[%s222 + $0xb0] sm:$0xf]
        %v358 = vld [vmem:[%s222 + $0xb4] sm:$0xff]
        %v359 = vld [vmem:[%s222 + $0xbc] sm:$0xf]
        %v360 = vld [vmem:[%s222 + $0xc0] sm:$0xff]
        %v361 = vld [vmem:[%s222 + $0xc8] sm:$0xf]
        %v362 = vld [vmem:[%s222 + $0xcc] sm:$0xff]
        %v363 = vld [vmem:[%s222 + $0xd4] sm:$0xf]
        %v364 = vld [vmem:[%s222 + $0xd8] sm:$0xff]
        %v365 = vld [vmem:[%s222 + $0xe0] sm:$0xf]
        %v366 = vld [vmem:[%s222 + $0xe4] sm:$0xff]
        %v367 = vld [vmem:[%s222 + $0xec] sm:$0xf]
        %v368 = vld [vmem:[%s222 + $0xf0] sm:$0xff]
        %v369 = vld [vmem:[%s222 + $0xf8] sm:$0xf]
        %v370 = vld [vmem:[%s222 + $0xfc] sm:$0xff]
        %v371 = vld [vmem:[%s222 + $0x104] sm:$0xf]
        %v372 = vld [vmem:[%s222 + $0x108] sm:$0xff]
        %v373 = vld [vmem:[%s222 + $0x110] sm:$0xf]
        %v374 = vld [vmem:[%s222 + $0x114] sm:$0xff]
        %v375 = vld [vmem:[%s222 + $0x11c] sm:$0xf]
        %v376 = vld [vmem:[%s222 + $0x120] sm:$0xff]
        %v377 = vld [vmem:[%s222 + $0x128] sm:$0xf]
        %v378 = vld [vmem:[%s222 + $0x12c] sm:$0xff]
        %v379 = vld [vmem:[%s222 + $0x134] sm:$0xf]
        %v380 = vld [vmem:[%s222 + $0x138] sm:$0xff]
        %v381 = vld [vmem:[%s222 + $0x140] sm:$0xf]
        %v382 = vld [vmem:[%s222 + $0x144] sm:$0xff]
        %v383 = vld [vmem:[%s222 + $0x14c] sm:$0xf]
        %v384 = vld [vmem:[%s222 + $0x150] sm:$0xff]
        %v385 = vld [vmem:[%s222 + $0x158] sm:$0xf]
        %v386 = vld [vmem:[%s222 + $0x15c] sm:$0xff]
        %v387 = vld [vmem:[%s222 + $0x164] sm:$0xf]
        %v388 = vld [vmem:[%s222 + $0x168] sm:$0xff]
        %v389 = vld [vmem:[%s222 + $0x170] sm:$0xf]
        %v390 = vld [vmem:[%s222 + $0x174] sm:$0xff]
        %v391 = vld [vmem:[%s222 + $0x17c] sm:$0xf]
        %v392 = vld [vmem:[#allocation6] sm:$0xf]
        %v393 = vld [vmem:[#allocation6 + $0x4] sm:$0xf]
        %v394 = vld [vmem:[#allocation6 + $0x8] sm:$0xf]
        %v395 = vld [vmem:[#allocation6 + $0xc] sm:$0xf]
        %v396 = vld [vmem:[#allocation6 + $0x10] sm:$0xf]
        %v397 = vld [vmem:[#allocation6 + $0x14] sm:$0xf]
        %v398 = vld [vmem:[#allocation6 + $0x18] sm:$0xf]
        %v399 = vld [vmem:[#allocation6 + $0x1c] sm:$0xf]
        %v400 = vld [vmem:[#allocation6 + $0x20] sm:$0xf]
        %v401 = vld [vmem:[#allocation6 + $0x24] sm:$0xf]
        %v402 = vld [vmem:[#allocation6 + $0x28] sm:$0xf]
        %v403 = vld [vmem:[#allocation6 + $0x2c] sm:$0xf]
        %v404 = vld [vmem:[#allocation6 + $0x30] sm:$0xf]
        %v405 = vld [vmem:[#allocation6 + $0x34] sm:$0xf]
        %v406 = vld [vmem:[#allocation6 + $0x38] sm:$0xf]
        %v407 = vld [vmem:[#allocation6 + $0x3c] sm:$0xf]
        %v408 = vld [vmem:[#allocation6 + $0x40] sm:$0xf]
        %v409 = vld [vmem:[#allocation6 + $0x44] sm:$0xf]
        %v410 = vld [vmem:[#allocation6 + $0x48] sm:$0xf]
        %v411 = vld [vmem:[#allocation6 + $0x4c] sm:$0xf]
        %v412 = vld [vmem:[#allocation6 + $0x50] sm:$0xf]
        %v413 = vld [vmem:[#allocation6 + $0x54] sm:$0xf]
        %v414 = vld [vmem:[#allocation6 + $0x58] sm:$0xf]
        %v415 = vld [vmem:[#allocation6 + $0x5c] sm:$0xf]
        %v416 = vld [vmem:[#allocation6 + $0x60] sm:$0xf]
        %v417 = vld [vmem:[#allocation6 + $0x64] sm:$0xf]
        %v418 = vld [vmem:[#allocation6 + $0x68] sm:$0xf]
        %v419 = vld [vmem:[#allocation6 + $0x6c] sm:$0xf]
        %v420 = vld [vmem:[#allocation6 + $0x70] sm:$0xf]
        %v421 = vld [vmem:[#allocation6 + $0x74] sm:$0xf]
        %v422 = vld [vmem:[#allocation6 + $0x78] sm:$0xf]
        %v423 = vld [vmem:[#allocation6 + $0x7c] sm:$0xf]
        %v424 = vld [vmem:[#allocation6 + $0x80] sm:$0xf]
        %v425 = vld [vmem:[#allocation6 + $0x84] sm:$0xf]
        %v426 = vld [vmem:[#allocation6 + $0x88] sm:$0xf]
        %v427 = vld [vmem:[#allocation6 + $0x8c] sm:$0xf]
        %v428 = vld [vmem:[#allocation6 + $0x90] sm:$0xf]
        %v429 = vld [vmem:[#allocation6 + $0x94] sm:$0xf]
        %v430 = vld [vmem:[#allocation6 + $0x98] sm:$0xf]
        %v431 = vld [vmem:[#allocation6 + $0x9c] sm:$0xf]
        %v432 = vld [vmem:[#allocation6 + $0xa0] sm:$0xf]
        %v433 = vld [vmem:[#allocation6 + $0xa4] sm:$0xf]
        %v434 = vld [vmem:[#allocation6 + $0xa8] sm:$0xf]
        %v435 = vld [vmem:[#allocation6 + $0xac] sm:$0xf]
        %v436 = vld [vmem:[#allocation6 + $0xb0] sm:$0xf]
        %v437 = vld [vmem:[#allocation6 + $0xb4] sm:$0xf]
        %v438 = vld [vmem:[#allocation6 + $0xb8] sm:$0xf]
        %v439 = vld [vmem:[#allocation6 + $0xbc] sm:$0xf]
        %v504 = vunpack.c.l.b16 %v328
        %v505 = vunpack.c.h.b16 %v328
        %v506 = vunpack.c.l.b16 %v329
        %v507 = vunpack.c.l.b16 %v330
        %v508 = vunpack.c.h.b16 %v330
        %v509 = vunpack.c.l.b16 %v331
        %v510 = vunpack.c.l.b16 %v332
        %v511 = vunpack.c.h.b16 %v332
        %v512 = vunpack.c.l.b16 %v333
        %v513 = vunpack.c.l.b16 %v334
        %v514 = vunpack.c.h.b16 %v334
        %v515 = vunpack.c.l.b16 %v335
        %v516 = vunpack.c.l.b16 %v336
        %v517 = vunpack.c.h.b16 %v336
        %v518 = vunpack.c.l.b16 %v337
        %v519 = vunpack.c.l.b16 %v338
        %v520 = vunpack.c.h.b16 %v338
        %v521 = vunpack.c.l.b16 %v339
        %v522 = vunpack.c.l.b16 %v340
        %v523 = vunpack.c.h.b16 %v340
        %v524 = vunpack.c.l.b16 %v341
        %v525 = vunpack.c.l.b16 %v342
        %v526 = vunpack.c.h.b16 %v342
        %v527 = vunpack.c.l.b16 %v343
        %v528 = vunpack.c.l.b16 %v344
        %v529 = vunpack.c.h.b16 %v344
        %v530 = vunpack.c.l.b16 %v345
        %v531 = vunpack.c.l.b16 %v346
        %v532 = vunpack.c.h.b16 %v346
        %v533 = vunpack.c.l.b16 %v347
        %v534 = vunpack.c.l.b16 %v348
        %v535 = vunpack.c.h.b16 %v348
        %v536 = vunpack.c.l.b16 %v349
        %v537 = vunpack.c.l.b16 %v350
        %v538 = vunpack.c.h.b16 %v350
        %v539 = vunpack.c.l.b16 %v351
        %v540 = vunpack.c.l.b16 %v352
        %v541 = vunpack.c.h.b16 %v352
        %v542 = vunpack.c.l.b16 %v353
        %v543 = vunpack.c.l.b16 %v354
        %v544 = vunpack.c.h.b16 %v354
        %v545 = vunpack.c.l.b16 %v355
        %v546 = vunpack.c.l.b16 %v356
        %v547 = vunpack.c.h.b16 %v356
        %v548 = vunpack.c.l.b16 %v357
        %v549 = vunpack.c.l.b16 %v358
        %v550 = vunpack.c.h.b16 %v358
        %v551 = vunpack.c.l.b16 %v359
        %v552 = vunpack.c.l.b16 %v360
        %v553 = vunpack.c.h.b16 %v360
        %v554 = vunpack.c.l.b16 %v361
        %v555 = vunpack.c.l.b16 %v362
        %v556 = vunpack.c.h.b16 %v362
        %v557 = vunpack.c.l.b16 %v363
        %v558 = vunpack.c.l.b16 %v364
        %v559 = vunpack.c.h.b16 %v364
        %v560 = vunpack.c.l.b16 %v365
        %v561 = vunpack.c.l.b16 %v366
        %v562 = vunpack.c.h.b16 %v366
        %v563 = vunpack.c.l.b16 %v367
        %v564 = vunpack.c.l.b16 %v368
        %v565 = vunpack.c.h.b16 %v368
        %v566 = vunpack.c.l.b16 %v369
        %v567 = vunpack.c.l.b16 %v370
        %v568 = vunpack.c.h.b16 %v370
        %v569 = vunpack.c.l.b16 %v371
        %v570 = vunpack.c.l.b16 %v372
        %v571 = vunpack.c.h.b16 %v372
        %v572 = vunpack.c.l.b16 %v373
        %v573 = vunpack.c.l.b16 %v374
        %v574 = vunpack.c.h.b16 %v374
        %v575 = vunpack.c.l.b16 %v375
        %v576 = vunpack.c.l.b16 %v376
        %v577 = vunpack.c.h.b16 %v376
        %v578 = vunpack.c.l.b16 %v377
        %v579 = vunpack.c.l.b16 %v378
        %v580 = vunpack.c.h.b16 %v378
        %v581 = vunpack.c.l.b16 %v379
        %v582 = vunpack.c.l.b16 %v380
        %v583 = vunpack.c.h.b16 %v380
        %v584 = vunpack.c.l.b16 %v381
        %v585 = vunpack.c.l.b16 %v382
        %v586 = vunpack.c.h.b16 %v382
        %v587 = vunpack.c.l.b16 %v383
        %v588 = vunpack.c.l.b16 %v384
        %v589 = vunpack.c.h.b16 %v384
        %v590 = vunpack.c.l.b16 %v385
        %v591 = vunpack.c.l.b16 %v386
        %v592 = vunpack.c.h.b16 %v386
        %v593 = vunpack.c.l.b16 %v387
        %v594 = vunpack.c.l.b16 %v388
        %v595 = vunpack.c.h.b16 %v388
        %v596 = vunpack.c.l.b16 %v389
        %v597 = vunpack.c.l.b16 %v390
        %v598 = vunpack.c.h.b16 %v390
        %v599 = vunpack.c.l.b16 %v391
        %v600 = vpack.c.b16 %v507, %v504
        %v601 = vpack.c.b16 %v508, %v505
        %v602 = vpack.c.b16 %v509, %v506
        %v603 = vpack.c.b16 %v513, %v510
        %v604 = vpack.c.b16 %v514, %v511
        %v605 = vpack.c.b16 %v515, %v512
        %v606 = vpack.c.b16 %v519, %v516
        %v607 = vpack.c.b16 %v520, %v517
        %v608 = vpack.c.b16 %v521, %v518
        %v609 = vpack.c.b16 %v525, %v522
        %v610 = vpack.c.b16 %v526, %v523
        %v611 = vpack.c.b16 %v527, %v524
        %v612 = vpack.c.b16 %v531, %v528
        %v613 = vpack.c.b16 %v532, %v529
        %v614 = vpack.c.b16 %v533, %v530
        %v615 = vpack.c.b16 %v537, %v534
        %v616 = vpack.c.b16 %v538, %v535
        %v617 = vpack.c.b16 %v539, %v536
        %v618 = vpack.c.b16 %v543, %v540
        %v619 = vpack.c.b16 %v544, %v541
        %v620 = vpack.c.b16 %v545, %v542
        %v621 = vpack.c.b16 %v549, %v546
        %v622 = vpack.c.b16 %v550, %v547
        %v623 = vpack.c.b16 %v551, %v548
        %v624 = vpack.c.b16 %v555, %v552
        %v625 = vpack.c.b16 %v556, %v553
        %v626 = vpack.c.b16 %v557, %v554
        %v627 = vpack.c.b16 %v561, %v558
        %v628 = vpack.c.b16 %v562, %v559
        %v629 = vpack.c.b16 %v563, %v560
        %v630 = vpack.c.b16 %v567, %v564
        %v631 = vpack.c.b16 %v568, %v565
        %v632 = vpack.c.b16 %v569, %v566
        %v633 = vpack.c.b16 %v573, %v570
        %v634 = vpack.c.b16 %v574, %v571
        %v635 = vpack.c.b16 %v575, %v572
        %v636 = vpack.c.b16 %v579, %v576
        %v637 = vpack.c.b16 %v580, %v577
        %v638 = vpack.c.b16 %v581, %v578
        %v639 = vpack.c.b16 %v585, %v582
        %v640 = vpack.c.b16 %v586, %v583
        %v641 = vpack.c.b16 %v587, %v584
        %v642 = vpack.c.b16 %v591, %v588
        %v643 = vpack.c.b16 %v592, %v589
        %v644 = vpack.c.b16 %v593, %v590
        %v645 = vpack.c.b16 %v597, %v594
        %v646 = vpack.c.b16 %v598, %v595
        %v647 = vpack.c.b16 %v599, %v596
        %v744 = vunpack.c.l.b16 %v392
        %v745 = vunpack.c.l.b16 %v393
        %v746 = vunpack.c.l.b16 %v394
        %v747 = vunpack.c.l.b16 %v395
        %v748 = vunpack.c.l.b16 %v396
        %v749 = vunpack.c.l.b16 %v397
        %v750 = vunpack.c.l.b16 %v398
        %v751 = vunpack.c.l.b16 %v399
        %v752 = vunpack.c.l.b16 %v400
        %v753 = vunpack.c.l.b16 %v401
        %v754 = vunpack.c.l.b16 %v402
        %v755 = vunpack.c.l.b16 %v403
        %v756 = vunpack.c.l.b16 %v404
        %v757 = vunpack.c.l.b16 %v405
        %v758 = vunpack.c.l.b16 %v406
        %v759 = vunpack.c.l.b16 %v407
        %v760 = vunpack.c.l.b16 %v408
        %v761 = vunpack.c.l.b16 %v409
        %v762 = vunpack.c.l.b16 %v410
        %v763 = vunpack.c.l.b16 %v411
        %v764 = vunpack.c.l.b16 %v412
        %v765 = vunpack.c.l.b16 %v413
        %v766 = vunpack.c.l.b16 %v414
        %v767 = vunpack.c.l.b16 %v415
        %v768 = vunpack.c.l.b16 %v416
        %v769 = vunpack.c.l.b16 %v417
        %v770 = vunpack.c.l.b16 %v418
        %v771 = vunpack.c.l.b16 %v419
        %v772 = vunpack.c.l.b16 %v420
        %v773 = vunpack.c.l.b16 %v421
        %v774 = vunpack.c.l.b16 %v422
        %v775 = vunpack.c.l.b16 %v423
        %v776 = vunpack.c.l.b16 %v424
        %v777 = vunpack.c.l.b16 %v425
        %v778 = vunpack.c.l.b16 %v426
        %v779 = vunpack.c.l.b16 %v427
        %v780 = vunpack.c.l.b16 %v428
        %v781 = vunpack.c.l.b16 %v429
        %v782 = vunpack.c.l.b16 %v430
        %v783 = vunpack.c.l.b16 %v431
        %v784 = vunpack.c.l.b16 %v432
        %v785 = vunpack.c.l.b16 %v433
        %v786 = vunpack.c.l.b16 %v434
        %v787 = vunpack.c.l.b16 %v435
        %v788 = vunpack.c.l.b16 %v436
        %v789 = vunpack.c.l.b16 %v437
        %v790 = vunpack.c.l.b16 %v438
        %v791 = vunpack.c.l.b16 %v439
        %v792 = vpack.c.b16 %v745, %v744
        %v793 = vpack.c.b16 %v747, %v746
        %v794 = vpack.c.b16 %v749, %v748
        %v795 = vpack.c.b16 %v751, %v750
        %v796 = vpack.c.b16 %v753, %v752
        %v797 = vpack.c.b16 %v755, %v754
        %v798 = vpack.c.b16 %v757, %v756
        %v799 = vpack.c.b16 %v759, %v758
        %v800 = vpack.c.b16 %v761, %v760
        %v801 = vpack.c.b16 %v763, %v762
        %v802 = vpack.c.b16 %v765, %v764
        %v803 = vpack.c.b16 %v767, %v766
        %v804 = vpack.c.b16 %v769, %v768
        %v805 = vpack.c.b16 %v771, %v770
        %v806 = vpack.c.b16 %v773, %v772
        %v807 = vpack.c.b16 %v775, %v774
        %v808 = vpack.c.b16 %v777, %v776
        %v809 = vpack.c.b16 %v779, %v778
        %v810 = vpack.c.b16 %v781, %v780
        %v811 = vpack.c.b16 %v783, %v782
        %v812 = vpack.c.b16 %v785, %v784
        %v813 = vpack.c.b16 %v787, %v786
        %v814 = vpack.c.b16 %v789, %v788
        %v815 = vpack.c.b16 %v791, %v790
        %840 = vmatprep.subr.bf16.mxu0 0
        %841 = vmatpush1.bf16.msra.mxu0 %v792
        %842 = vmatprep.subr.bf16.mxu0 0
        %843 = vmatpush1.bf16.msra.mxu0 %v793
        %844 = vmatprep.subr.bf16.mxu0 0
        %845 = vmatpush1.bf16.msra.mxu0 %v794
        %846 = vmatprep.subr.bf16.mxu0 0
        %847 = vmatpush1.bf16.msra.mxu0 %v795
        %848 = vmatprep.subr.bf16.mxu0 0
        %849 = vmatpush1.bf16.msra.mxu0 %v796
        %850 = vmatprep.subr.bf16.mxu0 0
        %851 = vmatpush1.bf16.msra.mxu0 %v797
        %852 = vmatprep.subr.bf16.mxu0 0
        %853 = vmatpush1.bf16.msra.mxu0 %v798
        %854 = vmatprep.subr.bf16.mxu0 0
        %855 = vmatpush1.bf16.msra.mxu0 %v799
        %856 = vmatprep.subr.bf16.mxu0 0
        %857 = vmatpush1.bf16.msra.mxu0 %v800
        %858 = vmatprep.subr.bf16.mxu0 0
        %859 = vmatpush1.bf16.msra.mxu0 %v801
        %860 = vmatprep.subr.bf16.mxu0 0
        %861 = vmatpush1.bf16.msra.mxu0 %v802
        %862 = vmatprep.subr.bf16.mxu0 0
        %863 = vmatpush1.bf16.msra.mxu0 %v803
        %864 = vmatprep.subr.bf16.mxu0 0
        %865 = vmatpush1.bf16.msra.mxu0 %v804
        %866 = vmatprep.subr.bf16.mxu0 0
        %867 = vmatpush1.bf16.msra.mxu0 %v805
        %868 = vmatprep.subr.bf16.mxu0 0
        %869 = vmatpush1.bf16.msra.mxu0 %v806
        %870 = vmatprep.subr.bf16.mxu0 0
        %871 = vmatpush1.bf16.msra.mxu0 %v807
        %872 = vmatprep.mubr.bf16.mxu0 %v601
        %873 = vmatmul.mubr.bf16.gmra.mrb[0].mxu0 %v600
        %v874 = vpop.f32.mrb[0].mxu0
        %v875 = vadd.f32 0.0, %v874
        %v876 = vpop.f32.mrb[0].mxu0
        %v877 = vpop.f32.mrb[0].mxu0
        %v878 = vadd.f32 0.0, %v877
        %v879 = vpop.f32.mrb[0].mxu0
        %880 = vmatprep.mubr.bf16.mxu0 %v604
        %881 = vmatmul.mubr.bf16.gmra.mrb[0].mxu0 %v603
        %v882 = vpop.f32.mrb[0].mxu0
        %v883 = vadd.f32 0.0, %v882
        %v884 = vpop.f32.mrb[0].mxu0
        %v885 = vpop.f32.mrb[0].mxu0
        %v886 = vadd.f32 0.0, %v885
        %v887 = vpop.f32.mrb[0].mxu0
        %888 = vmatprep.mubr.bf16.mxu0 %v607
        %889 = vmatmul.mubr.bf16.gmra.mrb[0].mxu0 %v606
        %v890 = vpop.f32.mrb[0].mxu0
        %v891 = vadd.f32 0.0, %v890
        %v892 = vpop.f32.mrb[0].mxu0
        %v893 = vpop.f32.mrb[0].mxu0
        %v894 = vadd.f32 0.0, %v893
        %v895 = vpop.f32.mrb[0].mxu0
        %896 = vmatprep.mubr.bf16.mxu0 %v610
        %897 = vmatmul.mubr.bf16.gmra.mrb[0].mxu0 %v609
        %v898 = vpop.f32.mrb[0].mxu0
        %v899 = vadd.f32 0.0, %v898
        %v900 = vpop.f32.mrb[0].mxu0
        %v901 = vpop.f32.mrb[0].mxu0
        %v902 = vadd.f32 0.0, %v901
        %v903 = vpop.f32.mrb[0].mxu0
        %904 = vmatprep.mubr.bf16.mxu0 %v613
        %905 = vmatmul.mubr.bf16.gmra.mrb[0].mxu0 %v612
        %v906 = vpop.f32.mrb[0].mxu0
        %v907 = vadd.f32 0.0, %v906
        %v908 = vpop.f32.mrb[0].mxu0
        %v909 = vpop.f32.mrb[0].mxu0
        %v910 = vadd.f32 0.0, %v909
        %v911 = vpop.f32.mrb[0].mxu0
        %912 = vmatprep.mubr.bf16.mxu0 %v616
        %913 = vmatmul.mubr.bf16.gmra.mrb[0].mxu0 %v615
        %v914 = vpop.f32.mrb[0].mxu0
        %v915 = vadd.f32 0.0, %v914
        %v916 = vpop.f32.mrb[0].mxu0
        %v917 = vpop.f32.mrb[0].mxu0
        %v918 = vadd.f32 0.0, %v917
        %v919 = vpop.f32.mrb[0].mxu0
        %920 = vmatprep.mubr.bf16.mxu0 %v619
        %921 = vmatmul.mubr.bf16.gmra.mrb[0].mxu0 %v618
        %v922 = vpop.f32.mrb[0].mxu0
        %v923 = vadd.f32 0.0, %v922
        %v924 = vpop.f32.mrb[0].mxu0
        %v925 = vpop.f32.mrb[0].mxu0
        %v926 = vadd.f32 0.0, %v925
        %v927 = vpop.f32.mrb[0].mxu0
        %928 = vmatprep.mubr.bf16.mxu0 %v622
        %929 = vmatmul.mubr.bf16.gmra.mrb[0].mxu0 %v621
        %v930 = vpop.f32.mrb[0].mxu0
        %v931 = vadd.f32 0.0, %v930
        %v932 = vpop.f32.mrb[0].mxu0
        %v933 = vpop.f32.mrb[0].mxu0
        %v934 = vadd.f32 0.0, %v933
        %v935 = vpop.f32.mrb[0].mxu0
        %936 = vmatprep.mubr.bf16.mxu0 %v625
        %937 = vmatmul.mubr.bf16.gmra.mrb[0].mxu0 %v624
        %v938 = vpop.f32.mrb[0].mxu0
        %v939 = vadd.f32 0.0, %v938
        %v940 = vpop.f32.mrb[0].mxu0
        %v941 = vpop.f32.mrb[0].mxu0
        %v942 = vadd.f32 0.0, %v941
        %v943 = vpop.f32.mrb[0].mxu0
        %944 = vmatprep.mubr.bf16.mxu0 %v628
        %945 = vmatmul.mubr.bf16.gmra.mrb[0].mxu0 %v627
        %v946 = vpop.f32.mrb[0].mxu0
        %v947 = vadd.f32 0.0, %v946
        %v948 = vpop.f32.mrb[0].mxu0
        %v949 = vpop.f32.mrb[0].mxu0
        %v950 = vadd.f32 0.0, %v949
        %v951 = vpop.f32.mrb[0].mxu0
        %952 = vmatprep.mubr.bf16.mxu0 %v631
        %953 = vmatmul.mubr.bf16.gmra.mrb[0].mxu0 %v630
        %v954 = vpop.f32.mrb[0].mxu0
        %v955 = vadd.f32 0.0, %v954
        %v956 = vpop.f32.mrb[0].mxu0
        %v957 = vpop.f32.mrb[0].mxu0
        %v958 = vadd.f32 0.0, %v957
        %v959 = vpop.f32.mrb[0].mxu0
        %960 = vmatprep.mubr.bf16.mxu0 %v634
        %961 = vmatmul.mubr.bf16.gmra.mrb[0].mxu0 %v633
        %v962 = vpop.f32.mrb[0].mxu0
        %v963 = vadd.f32 0.0, %v962
        %v964 = vpop.f32.mrb[0].mxu0
        %v965 = vpop.f32.mrb[0].mxu0
        %v966 = vadd.f32 0.0, %v965
        %v967 = vpop.f32.mrb[0].mxu0
        %968 = vmatprep.mubr.bf16.mxu0 %v637
        %969 = vmatmul.mubr.bf16.gmra.mrb[0].mxu0 %v636
        %v970 = vpop.f32.mrb[0].mxu0
        %v971 = vadd.f32 0.0, %v970
        %v972 = vpop.f32.mrb[0].mxu0
        %v973 = vpop.f32.mrb[0].mxu0
        %v974 = vadd.f32 0.0, %v973
        %v975 = vpop.f32.mrb[0].mxu0
        %976 = vmatprep.mubr.bf16.mxu0 %v640
        %977 = vmatmul.mubr.bf16.gmra.mrb[0].mxu0 %v639
        %v978 = vpop.f32.mrb[0].mxu0
        %v979 = vadd.f32 0.0, %v978
        %v980 = vpop.f32.mrb[0].mxu0
        %v981 = vpop.f32.mrb[0].mxu0
        %v982 = vadd.f32 0.0, %v981
        %v983 = vpop.f32.mrb[0].mxu0
        %984 = vmatprep.mubr.bf16.mxu0 %v643
        %985 = vmatmul.mubr.bf16.gmra.mrb[0].mxu0 %v642
        %v986 = vpop.f32.mrb[0].mxu0
        %v987 = vadd.f32 0.0, %v986
        %v988 = vpop.f32.mrb[0].mxu0
        %v989 = vpop.f32.mrb[0].mxu0
        %v990 = vadd.f32 0.0, %v989
        %v991 = vpop.f32.mrb[0].mxu0
        %992 = vmatprep.mubr.bf16.mxu0 %v646
        %993 = vmatmul.mubr.bf16.gmra.mrb[0].mxu0 %v645
        %v994 = vpop.f32.mrb[0].mxu0
        %v995 = vadd.f32 0.0, %v994
        %v996 = vpop.f32.mrb[0].mxu0
        %v997 = vpop.f32.mrb[0].mxu0
        %v998 = vadd.f32 0.0, %v997
        %v999 = vpop.f32.mrb[0].mxu0
        %1000 = vdwg.mxu0
        %1001 = vmatprep.subr.bf16.mxu0 0
        %1002 = vmatpush1.bf16.msra.mxu0 %v808
        %1003 = vmatprep.subr.bf16.mxu0 0
        %1004 = vmatpush1.bf16.msra.mxu0 %v809
        %1005 = vmatprep.subr.bf16.mxu0 0
        %1006 = vmatpush1.bf16.msra.mxu0 %v810
        %1007 = vmatprep.subr.bf16.mxu0 0
        %1008 = vmatpush1.bf16.msra.mxu0 %v811
        %1009 = vmatprep.subr.bf16.mxu0 0
        %1010 = vmatpush1.bf16.msra.mxu0 %v812
        %1011 = vmatprep.subr.bf16.mxu0 0
        %1012 = vmatpush1.bf16.msra.mxu0 %v813
        %1013 = vmatprep.subr.bf16.mxu0 0
        %1014 = vmatpush1.bf16.msra.mxu0 %v814
        %1015 = vmatprep.subr.bf16.mxu0 0
        %1016 = vmatpush1.bf16.msra.mxu0 %v815
        %1017 = vmatprep.subr.bf16.mxu0 0
        %1018 = vmatpush1.bf16.msra.mxu0 0
        %1019 = vmatprep.subr.bf16.mxu0 0
        %1020 = vmatpush1.bf16.msra.mxu0 0
        %1021 = vmatprep.subr.bf16.mxu0 0
        %1022 = vmatpush1.bf16.msra.mxu0 0
        %1023 = vmatprep.subr.bf16.mxu0 0
        %1024 = vmatpush1.bf16.msra.mxu0 0
        %1025 = vmatprep.subr.bf16.mxu0 0
        %1026 = vmatpush1.bf16.msra.mxu0 0
        %1027 = vmatprep.subr.bf16.mxu0 0
        %1028 = vmatpush1.bf16.msra.mxu0 0
        %1029 = vmatprep.subr.bf16.mxu0 0
        %1030 = vmatpush1.bf16.msra.mxu0 0
        %1031 = vmatprep.subr.bf16.mxu0 0
        %1032 = vmatpush1.bf16.msra.mxu0 0
        %1033 = vmatprep.mubr.bf16.mxu0 0
        %1034 = vmatmul.mubr.bf16.gmra.mrb[0].mxu0 %v602
        %v1035 = vpop.f32.mrb[0].mxu0
        %v1036 = vadd.f32 %v875, %v1035
        %v1037 = vpop.f32.mrb[0].mxu0
        %v1038 = vpop.f32.mrb[0].mxu0
        %v1039 = vadd.f32 %v878, %v1038
        %v1040 = vpop.f32.mrb[0].mxu0
        %1041 = vmatprep.mubr.bf16.mxu0 0
        %1042 = vmatmul.mubr.bf16.gmra.mrb[0].mxu0 %v605
        %v1043 = vpop.f32.mrb[0].mxu0
        %v1044 = vadd.f32 %v883, %v1043
        %v1045 = vpop.f32.mrb[0].mxu0
        %v1046 = vpop.f32.mrb[0].mxu0
        %v1047 = vadd.f32 %v886, %v1046
        %v1048 = vpop.f32.mrb[0].mxu0
        %1049 = vmatprep.mubr.bf16.mxu0 0
        %1050 = vmatmul.mubr.bf16.gmra.mrb[0].mxu0 %v608
        %v1051 = vpop.f32.mrb[0].mxu0
        %v1052 = vadd.f32 %v891, %v1051
        %v1053 = vpop.f32.mrb[0].mxu0
        %v1054 = vpop.f32.mrb[0].mxu0
        %v1055 = vadd.f32 %v894, %v1054
        %v1056 = vpop.f32.mrb[0].mxu0
        %1057 = vmatprep.mubr.bf16.mxu0 0
        %1058 = vmatmul.mubr.bf16.gmra.mrb[0].mxu0 %v611
        %v1059 = vpop.f32.mrb[0].mxu0
        %v1060 = vadd.f32 %v899, %v1059
        %v1061 = vpop.f32.mrb[0].mxu0
        %v1062 = vpop.f32.mrb[0].mxu0
        %v1063 = vadd.f32 %v902, %v1062
        %v1064 = vpop.f32.mrb[0].mxu0
        %1065 = vmatprep.mubr.bf16.mxu0 0
        %1066 = vmatmul.mubr.bf16.gmra.mrb[0].mxu0 %v614
        %v1067 = vpop.f32.mrb[0].mxu0
        %v1068 = vadd.f32 %v907, %v1067
        %v1069 = vpop.f32.mrb[0].mxu0
        %v1070 = vpop.f32.mrb[0].mxu0
        %v1071 = vadd.f32 %v910, %v1070
        %v1072 = vpop.f32.mrb[0].mxu0
        %1073 = vmatprep.mubr.bf16.mxu0 0
        %1074 = vmatmul.mubr.bf16.gmra.mrb[0].mxu0 %v617
        %v1075 = vpop.f32.mrb[0].mxu0
        %v1076 = vadd.f32 %v915, %v1075
        %v1077 = vpop.f32.mrb[0].mxu0
        %v1078 = vpop.f32.mrb[0].mxu0
        %v1079 = vadd.f32 %v918, %v1078
        %v1080 = vpop.f32.mrb[0].mxu0
        %1081 = vmatprep.mubr.bf16.mxu0 0
        %1082 = vmatmul.mubr.bf16.gmra.mrb[0].mxu0 %v620
        %v1083 = vpop.f32.mrb[0].mxu0
        %v1084 = vadd.f32 %v923, %v1083
        %v1085 = vpop.f32.mrb[0].mxu0
        %v1086 = vpop.f32.mrb[0].mxu0
        %v1087 = vadd.f32 %v926, %v1086
        %v1088 = vpop.f32.mrb[0].mxu0
        %1089 = vmatprep.mubr.bf16.mxu0 0
        %1090 = vmatmul.mubr.bf16.gmra.mrb[0].mxu0 %v623
        %v1091 = vpop.f32.mrb[0].mxu0
        %v1092 = vadd.f32 %v931, %v1091
        %v1093 = vpop.f32.mrb[0].mxu0
        %v1094 = vpop.f32.mrb[0].mxu0
        %v1095 = vadd.f32 %v934, %v1094
        %v1096 = vpop.f32.mrb[0].mxu0
        %1097 = vmatprep.mubr.bf16.mxu0 0
        %1098 = vmatmul.mubr.bf16.gmra.mrb[0].mxu0 %v626
        %v1099 = vpop.f32.mrb[0].mxu0
        %v1100 = vadd.f32 %v939, %v1099
        %v1101 = vpop.f32.mrb[0].mxu0
        %v1102 = vpop.f32.mrb[0].mxu0
        %v1103 = vadd.f32 %v942, %v1102
        %v1104 = vpop.f32.mrb[0].mxu0
        %1105 = vmatprep.mubr.bf16.mxu0 0
        %1106 = vmatmul.mubr.bf16.gmra.mrb[0].mxu0 %v629
        %v1107 = vpop.f32.mrb[0].mxu0
        %v1108 = vadd.f32 %v947, %v1107
        %v1109 = vpop.f32.mrb[0].mxu0
        %v1110 = vpop.f32.mrb[0].mxu0
        %v1111 = vadd.f32 %v950, %v1110
        %v1112 = vpop.f32.mrb[0].mxu0
        %1113 = vmatprep.mubr.bf16.mxu0 0
        %1114 = vmatmul.mubr.bf16.gmra.mrb[0].mxu0 %v632
        %v1115 = vpop.f32.mrb[0].mxu0
        %v1116 = vadd.f32 %v955, %v1115
        %v1117 = vpop.f32.mrb[0].mxu0
        %v1118 = vpop.f32.mrb[0].mxu0
        %v1119 = vadd.f32 %v958, %v1118
        %v1120 = vpop.f32.mrb[0].mxu0
        %1121 = vmatprep.mubr.bf16.mxu0 0
        %1122 = vmatmul.mubr.bf16.gmra.mrb[0].mxu0 %v635
        %v1123 = vpop.f32.mrb[0].mxu0
        %v1124 = vadd.f32 %v963, %v1123
        %v1125 = vpop.f32.mrb[0].mxu0
        %v1126 = vpop.f32.mrb[0].mxu0
        %v1127 = vadd.f32 %v966, %v1126
        %v1128 = vpop.f32.mrb[0].mxu0
        %1129 = vmatprep.mubr.bf16.mxu0 0
        %1130 = vmatmul.mubr.bf16.gmra.mrb[0].mxu0 %v638
        %v1131 = vpop.f32.mrb[0].mxu0
        %v1132 = vadd.f32 %v971, %v1131
        %v1133 = vpop.f32.mrb[0].mxu0
        %v1134 = vpop.f32.mrb[0].mxu0
        %v1135 = vadd.f32 %v974, %v1134
        %v1136 = vpop.f32.mrb[0].mxu0
        %1137 = vmatprep.mubr.bf16.mxu0 0
        %1138 = vmatmul.mubr.bf16.gmra.mrb[0].mxu0 %v641
        %v1139 = vpop.f32.mrb[0].mxu0
        %v1140 = vadd.f32 %v979, %v1139
        %v1141 = vpop.f32.mrb[0].mxu0
        %v1142 = vpop.f32.mrb[0].mxu0
        %v1143 = vadd.f32 %v982, %v1142
        %v1144 = vpop.f32.mrb[0].mxu0
        %1145 = vmatprep.mubr.bf16.mxu0 0
        %1146 = vmatmul.mubr.bf16.gmra.mrb[0].mxu0 %v644
        %v1147 = vpop.f32.mrb[0].mxu0
        %v1148 = vadd.f32 %v987, %v1147
        %v1149 = vpop.f32.mrb[0].mxu0
        %v1150 = vpop.f32.mrb[0].mxu0
        %v1151 = vadd.f32 %v990, %v1150
        %v1152 = vpop.f32.mrb[0].mxu0
        %1153 = vmatprep.mubr.bf16.mxu0 0
        %1154 = vmatmul.mubr.bf16.gmra.mrb[0].mxu0 %v647
        %v1155 = vpop.f32.mrb[0].mxu0
        %v1156 = vadd.f32 %v995, %v1155
        %v1157 = vpop.f32.mrb[0].mxu0
        %v1158 = vpop.f32.mrb[0].mxu0
        %v1159 = vadd.f32 %v998, %v1158
        %v1160 = vpop.f32.mrb[0].mxu0
        %1161 = vdwg.mxu0
        %v1162 = vadd.f32 %v296, %v1036
        %v1163 = vadd.f32 %v297, %v1039
        %v1164 = vadd.f32 %v298, %v1044
        %v1165 = vadd.f32 %v299, %v1047
        %v1166 = vadd.f32 %v300, %v1052
        %v1167 = vadd.f32 %v301, %v1055
        %v1168 = vadd.f32 %v302, %v1060
        %v1169 = vadd.f32 %v303, %v1063
        %v1170 = vadd.f32 %v304, %v1068
        %v1171 = vadd.f32 %v305, %v1071
        %v1172 = vadd.f32 %v306, %v1076
        %v1173 = vadd.f32 %v307, %v1079
        %v1174 = vadd.f32 %v308, %v1084
        %v1175 = vadd.f32 %v309, %v1087
        %v1176 = vadd.f32 %v310, %v1092
        %v1177 = vadd.f32 %v311, %v1095
        %v1178 = vadd.f32 %v312, %v1100
        %v1179 = vadd.f32 %v313, %v1103
        %v1180 = vadd.f32 %v314, %v1108
        %v1181 = vadd.f32 %v315, %v1111
        %v1182 = vadd.f32 %v316, %v1116
        %v1183 = vadd.f32 %v317, %v1119
        %v1184 = vadd.f32 %v318, %v1124
        %v1185 = vadd.f32 %v319, %v1127
        %v1186 = vadd.f32 %v320, %v1132
        %v1187 = vadd.f32 %v321, %v1135
        %v1188 = vadd.f32 %v322, %v1140
        %v1189 = vadd.f32 %v323, %v1143
        %v1190 = vadd.f32 %v324, %v1148
        %v1191 = vadd.f32 %v325, %v1151
        %v1192 = vadd.f32 %v326, %v1156
        %v1193 = vadd.f32 %v327, %v1159
        %1194 = vst [vmem:[#allocation2] sm:$0xff] %v1162
        %1195 = vst [vmem:[#allocation2 + $0x8] sm:$0xff] %v1163
        %1196 = vst [vmem:[#allocation2 + $0x10] sm:$0xff] %v1164
        %1197 = vst [vmem:[#allocation2 + $0x18] sm:$0xff] %v1165
        %1198 = vst [vmem:[#allocation2 + $0x20] sm:$0xff] %v1166
        %1199 = vst [vmem:[#allocation2 + $0x28] sm:$0xff] %v1167
        %1200 = vst [vmem:[#allocation2 + $0x30] sm:$0xff] %v1168
        %1201 = vst [vmem:[#allocation2 + $0x38] sm:$0xff] %v1169
        %1202 = vst [vmem:[#allocation2 + $0x40] sm:$0xff] %v1170
        %1203 = vst [vmem:[#allocation2 + $0x48] sm:$0xff] %v1171
        %1204 = vst [vmem:[#allocation2 + $0x50] sm:$0xff] %v1172
        %1205 = vst [vmem:[#allocation2 + $0x58] sm:$0xff] %v1173
        %1206 = vst [vmem:[#allocation2 + $0x60] sm:$0xff] %v1174
        %1207 = vst [vmem:[#allocation2 + $0x68] sm:$0xff] %v1175
        %1208 = vst [vmem:[#allocation2 + $0x70] sm:$0xff] %v1176
        %1209 = vst [vmem:[#allocation2 + $0x78] sm:$0xff] %v1177
        %1210 = vst [vmem:[#allocation2 + $0x80] sm:$0xff] %v1178
        %1211 = vst [vmem:[#allocation2 + $0x88] sm:$0xff] %v1179
        %1212 = vst [vmem:[#allocation2 + $0x90] sm:$0xff] %v1180
        %1213 = vst [vmem:[#allocation2 + $0x98] sm:$0xff] %v1181
        %1214 = vst [vmem:[#allocation2 + $0xa0] sm:$0xff] %v1182
        %1215 = vst [vmem:[#allocation2 + $0xa8] sm:$0xff] %v1183
        %1216 = vst [vmem:[#allocation2 + $0xb0] sm:$0xff] %v1184
        %1217 = vst [vmem:[#allocation2 + $0xb8] sm:$0xff] %v1185
        %1218 = vst [vmem:[#allocation2 + $0xc0] sm:$0xff] %v1186
        %1219 = vst [vmem:[#allocation2 + $0xc8] sm:$0xff] %v1187
        %1220 = vst [vmem:[#allocation2 + $0xd0] sm:$0xff] %v1188
        %1221 = vst [vmem:[#allocation2 + $0xd8] sm:$0xff] %v1189
        %1222 = vst [vmem:[#allocation2 + $0xe0] sm:$0xff] %v1190
        %1223 = vst [vmem:[#allocation2 + $0xe8] sm:$0xff] %v1191
        %1224 = vst [vmem:[#allocation2 + $0xf0] sm:$0xff] %v1192
        %1225 = vst [vmem:[#allocation2 + $0xf8] sm:$0xff] %v1193
        // Predicated region
        $region45: #{tpu_custom_call.1} parent=31 // pred_check
          %p1226 = pneg %p260
        $region46: #{tpu_custom_call.1} parent=31 // pred_check_branch
          %1228 = sbr.rel (%p1226) target = $region48
        $region47: #{tpu_custom_call.1} parent=31 // pred_region
          %v1229 = vld [vmem:[#allocation2] sm:$0xff]
          %v1230 = vld [vmem:[#allocation2 + $0x8] sm:$0xff]
          %v1231 = vld [vmem:[#allocation2 + $0x10] sm:$0xff]
          %v1232 = vld [vmem:[#allocation2 + $0x18] sm:$0xff]
          %v1233 = vld [vmem:[#allocation2 + $0x20] sm:$0xff]
          %v1234 = vld [vmem:[#allocation2 + $0x28] sm:$0xff]
          %v1235 = vld [vmem:[#allocation2 + $0x30] sm:$0xff]
          %v1236 = vld [vmem:[#allocation2 + $0x38] sm:$0xff]
          %v1237 = vld [vmem:[#allocation2 + $0x40] sm:$0xff]
          %v1238 = vld [vmem:[#allocation2 + $0x48] sm:$0xff]
          %v1239 = vld [vmem:[#allocation2 + $0x50] sm:$0xff]
          %v1240 = vld [vmem:[#allocation2 + $0x58] sm:$0xff]
          %v1241 = vld [vmem:[#allocation2 + $0x60] sm:$0xff]
          %v1242 = vld [vmem:[#allocation2 + $0x68] sm:$0xff]
          %v1243 = vld [vmem:[#allocation2 + $0x70] sm:$0xff]
          %v1244 = vld [vmem:[#allocation2 + $0x78] sm:$0xff]
          %v1245 = vld [vmem:[#allocation2 + $0x80] sm:$0xff]
          %v1246 = vld [vmem:[#allocation2 + $0x88] sm:$0xff]
          %v1247 = vld [vmem:[#allocation2 + $0x90] sm:$0xff]
          %v1248 = vld [vmem:[#allocation2 + $0x98] sm:$0xff]
          %v1249 = vld [vmem:[#allocation2 + $0xa0] sm:$0xff]
          %v1250 = vld [vmem:[#allocation2 + $0xa8] sm:$0xff]
          %v1251 = vld [vmem:[#allocation2 + $0xb0] sm:$0xff]
          %v1252 = vld [vmem:[#allocation2 + $0xb8] sm:$0xff]
          %v1253 = vld [vmem:[#allocation2 + $0xc0] sm:$0xff]
          %v1254 = vld [vmem:[#allocation2 + $0xc8] sm:$0xff]
          %v1255 = vld [vmem:[#allocation2 + $0xd0] sm:$0xff]
          %v1256 = vld [vmem:[#allocation2 + $0xd8] sm:$0xff]
          %v1257 = vld [vmem:[#allocation2 + $0xe0] sm:$0xff]
          %v1258 = vld [vmem:[#allocation2 + $0xe8] sm:$0xff]
          %v1259 = vld [vmem:[#allocation2 + $0xf0] sm:$0xff]
          %v1260 = vld [vmem:[#allocation2 + $0xf8] sm:$0xff]
          %v1261 = vld [vmem:[%s257] sm:$0x1]
          %v1263 = vlaneseq
          %v1264 = vshrl.u32 %v1263, 7
          %v1265 = vsub.s32 0, %v1264
          %v1266 = vrot.slane %v1261, %v1265
          %v1268 = vadd.f32 %v1229, %v1266
          %v1269 = vadd.f32 %v1230, %v1266
          %v1270 = vadd.f32 %v1231, %v1266
          %v1271 = vadd.f32 %v1232, %v1266
          %v1272 = vadd.f32 %v1233, %v1266
          %v1273 = vadd.f32 %v1234, %v1266
          %v1274 = vadd.f32 %v1235, %v1266
          %v1275 = vadd.f32 %v1236, %v1266
          %v1276 = vadd.f32 %v1237, %v1266
          %v1277 = vadd.f32 %v1238, %v1266
          %v1278 = vadd.f32 %v1239, %v1266
          %v1279 = vadd.f32 %v1240, %v1266
          %v1280 = vadd.f32 %v1241, %v1266
          %v1281 = vadd.f32 %v1242, %v1266
          %v1282 = vadd.f32 %v1243, %v1266
          %v1283 = vadd.f32 %v1244, %v1266
          %v1284 = vadd.f32 %v1245, %v1266
          %v1285 = vadd.f32 %v1246, %v1266
          %v1286 = vadd.f32 %v1247, %v1266
          %v1287 = vadd.f32 %v1248, %v1266
          %v1288 = vadd.f32 %v1249, %v1266
          %v1289 = vadd.f32 %v1250, %v1266
          %v1290 = vadd.f32 %v1251, %v1266
          %v1291 = vadd.f32 %v1252, %v1266
          %v1292 = vadd.f32 %v1253, %v1266
          %v1293 = vadd.f32 %v1254, %v1266
          %v1294 = vadd.f32 %v1255, %v1266
          %v1295 = vadd.f32 %v1256, %v1266
          %v1296 = vadd.f32 %v1257, %v1266
          %v1297 = vadd.f32 %v1258, %v1266
          %v1298 = vadd.f32 %v1259, %v1266
          %v1299 = vadd.f32 %v1260, %v1266
          %1300 = vst [vmem:[%s251] sm:$0xff] %v1268
          %1301 = vst [vmem:[%s251 + $0x8] sm:$0xff] %v1269
          %1302 = vst [vmem:[%s251 + $0x10] sm:$0xff] %v1270
          %1303 = vst [vmem:[%s251 + $0x18] sm:$0xff] %v1271
          %1304 = vst [vmem:[%s251 + $0x20] sm:$0xff] %v1272
          %1305 = vst [vmem:[%s251 + $0x28] sm:$0xff] %v1273
          %1306 = vst [vmem:[%s251 + $0x30] sm:$0xff] %v1274
          %1307 = vst [vmem:[%s251 + $0x38] sm:$0xff] %v1275
          %1308 = vst [vmem:[%s251 + $0x40] sm:$0xff] %v1276
          %1309 = vst [vmem:[%s251 + $0x48] sm:$0xff] %v1277
          %1310 = vst [vmem:[%s251 + $0x50] sm:$0xff] %v1278
          %1311 = vst [vmem:[%s251 + $0x58] sm:$0xff] %v1279
          %1312 = vst [vmem:[%s251 + $0x60] sm:$0xff] %v1280
          %1313 = vst [vmem:[%s251 + $0x68] sm:$0xff] %v1281
          %1314 = vst [vmem:[%s251 + $0x70] sm:$0xff] %v1282
          %1315 = vst [vmem:[%s251 + $0x78] sm:$0xff] %v1283
          %1316 = vst [vmem:[%s251 + $0x80] sm:$0xff] %v1284
          %1317 = vst [vmem:[%s251 + $0x88] sm:$0xff] %v1285
          %1318 = vst [vmem:[%s251 + $0x90] sm:$0xff] %v1286
          %1319 = vst [vmem:[%s251 + $0x98] sm:$0xff] %v1287
          %1320 = vst [vmem:[%s251 + $0xa0] sm:$0xff] %v1288
          %1321 = vst [vmem:[%s251 + $0xa8] sm:$0xff] %v1289
          %1322 = vst [vmem:[%s251 + $0xb0] sm:$0xff] %v1290
          %1323 = vst [vmem:[%s251 + $0xb8] sm:$0xff] %v1291
          %1324 = vst [vmem:[%s251 + $0xc0] sm:$0xff] %v1292
          %1325 = vst [vmem:[%s251 + $0xc8] sm:$0xff] %v1293
          %1326 = vst [vmem:[%s251 + $0xd0] sm:$0xff] %v1294
          %1327 = vst [vmem:[%s251 + $0xd8] sm:$0xff] %v1295
          %1328 = vst [vmem:[%s251 + $0xe0] sm:$0xff] %v1296
          %1329 = vst [vmem:[%s251 + $0xe8] sm:$0xff] %v1297
          %1330 = vst [vmem:[%s251 + $0xf0] sm:$0xff] %v1298
          %1331 = vst [vmem:[%s251 + $0xf8] sm:$0xff] %v1299
        $region48: #{tpu_custom_call.1} parent=31 // pred_fallthru
          _
        %s1332 = sand.u32 %s132, 1
        %s1333 = scalar_lea.sflag [#allocation5], %s1332
        %s1334 = sand.u32 %s132, 1
        %s1335 = smul.addr %s1334, 256
        %s1336 = scalar_lea.vmem [#allocation8], %s1335
        // Predicated region
        $region49: #{tpu_custom_call.1} parent=31 // pred_check
          %p1337 = pneg %p142
        $region50: #{tpu_custom_call.1} parent=31 // pred_check_branch
          %1339 = sbr.rel (%p1337) target = $region52
        $region51: #{tpu_custom_call.1} parent=31 // pred_region
          %s1340 = smul.u32 32, %s26
          %s1342 = ssub.s32 4096, 4096
          %1343 = vsyncadd %s1333, %s1342
          %s1344 = sadd.s32 %s27, %s1340
          %s1345 = smul.addr %s1344, 128
          %s1346 = scalar_lea.hbm %s3, %s1345
          %s1347 = sshll.u32 %s1336, 4
          %s1348 = int_to_ptr.vmem [resolvable:$true] %s1347
          %1353 = dma.vmem_to_hbm [thread:$0]  %s1348, 4096, %s1346, %s1333, 128, 128, 8
        $region52: #{tpu_custom_call.1} parent=31 // pred_fallthru
          _
      $region32: #{tpu_custom_call.1} parent=5 // pred_fallthru
        _
      %p1354 = scmp.le.s32.totalorder 2, %s16
      // Predicated region
      $region53: #{tpu_custom_call.1} parent=5 // pred_check
        %p1355 = pneg %p1354
      $region54: #{tpu_custom_call.1} parent=5 // pred_check_branch
        %1357 = sbr.rel (%p1355) target = $region56
      $region55: #{tpu_custom_call.1} parent=5 // pred_region
        %s1358 = ssub.s32 %s16, 2
        // Predicated region
        $region57: #{tpu_custom_call.1} parent=55 // pred_check
          %p1359 = pneg %p148
        $region58: #{tpu_custom_call.1} parent=55 // pred_check_branch
          %1361 = sbr.rel (%p1359) target = $region60
        $region59: #{tpu_custom_call.1} parent=55 // pred_region
          %s1362 = sand.u32 %s133, 1
          %s1363 = scalar_lea.sflag [#allocation5], %s1362
          %s1364 = sand.u32 %s133, 1
          %s1365 = smul.addr %s1364, 256
          %s1366 = scalar_lea.vmem [#allocation8], %s1365
          %1367 = dma.done %s1363, 4096
        $region60: #{tpu_custom_call.1} parent=55 // pred_fallthru
          _
      $region56: #{tpu_custom_call.1} parent=5 // pred_fallthru
        _
    $region6: #{tpu_custom_call.1} parent=1 // loop_footer
      %s20 = sadd.s32 1, %s16
    $region7: #{tpu_custom_call.1} parent=1 // loop_footer_branch
      %15 = sbr.rel target = $region3
    $region8: #{tpu_custom_call.1} parent=1 // loop_exit
      _
    %1368 = vsyncpa [#allocation4], 1
    %s1369 = scalar_lea.sflag [#allocation4], 1
    %1370 = vsyncpa %s1369, 1
    %1371 = vsyncpa [#allocation7], 1
    %1372 = vsyncpa [#allocation5], 1
    %s1373 = scalar_lea.sflag [#allocation5], 1
    %1374 = vsyncpa %s1373, 1

</llo_original>
